<compile_context>
chip_gen: v5e
topology: v5e:2x2
jax: 0.10.0
libtpu: 0.0.40
codegen_flags: <defaults>
</compile_context>

<pallas_src>
import functools
import math

import jax
import jax.numpy as jnp
from jax.experimental import pallas as pl
from jax.experimental.pallas import tpu as pltpu

_MIB = 1024 * 1024


def _round_up(x, m):
    return ((x + m - 1) // m) * m


def _vmem_capacity_bytes():
    try:
        return int(pltpu.get_tpu_info().vmem_capacity_bytes)
    except Exception:
        return 64 * _MIB  # conservative fallback = v7x per-TensorCore VMEM


def _choose_dp(D):
    """Lane-pad the feature dim: 128-aligned, bumped to 256 when D is within
    ~25% of a 256 boundary (full-width passes on 256x256 MXUs)."""
    dp = _round_up(D, 128)
    if dp % 256 != 0:
        dp256 = _round_up(D, 256)
        if (dp256 - D) <= 0.25 * D:
            dp = dp256
    return dp


# ----------------------------------------------------------------------------
# Kernel
# ----------------------------------------------------------------------------
def _odefunc_kernel(x_ref, w_ref, b_ref, o_ref, *, depth, eps,
                    compute_dtype, approx_recip):
    # x_ref: (TB, Dp)        activation tile (f32 or compute_dtype)
    # w_ref: (depth, Dp, Dp) pre-transposed weights, compute_dtype, VMEM-resident
    # b_ref: (depth, Dp)     biases, f32, VMEM-resident
    # o_ref: (TB, Dp)        f32 output tile
    h = x_ref[...]
    for layer in range(depth):
        wt = w_ref[layer]                         # (Dp, Dp)
        b = b_ref[layer:layer + 1, :]             # (1, Dp) f32
        h = jnp.dot(h.astype(compute_dtype), wt,
                    preferred_element_type=jnp.float32) + b
        if layer < depth - 1:
            # LeakyReLU(0.2): max(h, 0.2*h) is exact for slope < 1.
            h = jnp.maximum(h, 0.2 * h)

    # Row-wise L2 norm over dim=1 (keepdim), divide by (norm + eps).
    # Padded lanes are exactly 0 (zero-padded weights/biases) -> norm unaffected.
    nrm = jnp.sqrt(jnp.sum(h * h, axis=1, keepdims=True))
    inv = pl.reciprocal(nrm + eps, approx=approx_recip)
    o_ref[...] = (h * inv).astype(o_ref.dtype)


# ----------------------------------------------------------------------------
# Parameter preparation (hoist out of the per-call path)
# ----------------------------------------------------------------------------
def prepare_params(weights, biases, compute_dtype=jnp.bfloat16):
    """Transpose, cast, zero-pad and stack the Linear parameters once.

    weights : list of depth arrays, (dim, dim) torch Linear layout (out, in).
    biases  : list of depth arrays, (dim,).
    Returns (w_stack (depth, Dp, Dp) compute_dtype, b_stack (depth, Dp) f32, D).
    """
    depth = len(weights)
    D = weights[0].shape[1]
    Dp = _choose_dp(D)
    w_stack = jnp.zeros((depth, Dp, Dp), compute_dtype)
    b_stack = jnp.zeros((depth, Dp), jnp.float32)
    for l, (w, b) in enumerate(zip(weights, biases)):
        wt = jnp.asarray(w, jnp.float32).T                     # (in, out)
        w_stack = w_stack.at[l, :D, :D].set(wt.astype(compute_dtype))
        b_stack = b_stack.at[l, :D].set(jnp.asarray(b, jnp.float32))
    return w_stack, b_stack, D


# ----------------------------------------------------------------------------
# Forward wrappers
# ----------------------------------------------------------------------------
def odefunc_forward_prepared(t, x, w_stack, b_stack, D, eps=1e-6,
                             compute_dtype=jnp.bfloat16, block_b=512):
    """Forward pass using pre-prepared (stacked/padded) parameters."""
    del t  # unused by the reference forward pass
    depth, Dp, _ = w_stack.shape
    B = x.shape[0]

    c_item = jnp.dtype(compute_dtype).itemsize
    vmem_cap = _vmem_capacity_bytes()
    budget = int(0.85 * vmem_cap)

    # Resident params (single-buffered via pl.Buffered(1)).
    resident = depth * Dp * Dp * c_item + depth * Dp * 4
    if resident > budget - 8 * _MIB:
        # TODO(synk): add the weight-streaming grid-axis fallback here.
        raise ValueError(
            f"resident-weight scheme needs {resident/_MIB:.1f} MiB, exceeds "
            f"VMEM budget {budget/_MIB:.1f} MiB; stream weights instead.")

    # Batch tile: as large as VMEM allows (double-buffered x + f32 out tiles),
    # capped at block_b, rounded to sublane multiples of 8.
    per_row = Dp * (2 * 4 + 2 * 4)  # conservative: f32 x + f32 out
    avail = budget - resident - 4 * _MIB
    max_tb = max(8, (avail // per_row) // 8 * 8)
    TB = max(8, min(block_b, max_tb, _round_up(B, 8)))

    # Guarantee >= 2 grid steps when the batch allows it so the "parallel" axis
    # can split across both v7x TensorCores (no-op on v5e/v6e).
    if B >= 16 and _round_up(B, TB) // TB < 2:
        TB = max(8, _round_up(math.ceil(B / 2), 8))
    Bp = _round_up(B, TB)

    needs_pad = (Dp != D) or (Bp != B)
    if needs_pad:
        # Pad directly in compute_dtype: halves x DMA + its double buffer.
        x_in = jnp.zeros((Bp, Dp), compute_dtype).at[:B, :D].set(
            jnp.asarray(x).astype(compute_dtype))
    else:
        x_in = x  # aligned fast path: no extra HBM pass

    x_item = jnp.dtype(x_in.dtype).itemsize
    need = resident + 2 * TB * Dp * x_item + 2 * TB * Dp * 4
    vmem_limit = int(min(max(need * 1.5, 32 * _MIB), budget))

    approx_recip = jnp.dtype(compute_dtype) != jnp.dtype(jnp.float32)
    kernel = functools.partial(_odefunc_kernel, depth=depth, eps=eps,
                               compute_dtype=compute_dtype,
                               approx_recip=approx_recip)

    in_specs = [
        # activations stream over the batch grid (auto double-buffered DMA)
        pl.BlockSpec((TB, Dp), lambda i: (i, 0)),
        # weights / biases: constant index_map -> VMEM-resident, single buffer
        pl.BlockSpec((depth, Dp, Dp), lambda i: (0, 0, 0),
                     pipeline_mode=pl.Buffered(1)),
        pl.BlockSpec((depth, Dp), lambda i: (0, 0),
                     pipeline_mode=pl.Buffered(1)),
    ]
    out_specs = pl.BlockSpec((TB, Dp), lambda i: (i, 0))

    out_p = pl.pallas_call(
        kernel,
        out_shape=jax.ShapeDtypeStruct((Bp, Dp), jnp.float32),
        grid=(Bp // TB,),
        in_specs=in_specs,
        out_specs=out_specs,
        compiler_params=pltpu.CompilerParams(
            dimension_semantics=("parallel",),
            vmem_limit_bytes=vmem_limit),
    )(x_in, w_stack, b_stack)

    if needs_pad:
        return out_p[:B, :D]
    return out_p


def odefunc_forward(t, x, weights, biases, eps=1e-6,
                    compute_dtype=jnp.bfloat16, block_b=512):
    """Convenience wrapper matching the PyTorch forward signature.

    For repeated calls (ODE integration), call prepare_params() once and use
    odefunc_forward_prepared() to avoid re-materializing the weights each call.
    """
    w_stack, b_stack, D = prepare_params(weights, biases, compute_dtype)
    return odefunc_forward_prepared(t, x, w_stack, b_stack, D, eps=eps,
                                    compute_dtype=compute_dtype,
                                    block_b=block_b)


# ----------------------------------------------------------------------------
# Reference + demo
# ----------------------------------------------------------------------------
def _init_params(key, dim, depth):
    """Deterministic PyTorch-Linear-style init: U(-1/sqrt(dim), 1/sqrt(dim))."""
    weights, biases = [], []
    bound = 1.0 / (dim ** 0.5)
    for _ in range(depth):
        key, kw, kb = jax.random.split(key, 3)
        weights.append(jax.random.uniform(kw, (dim, dim), jnp.float32, -bound, bound))
        biases.append(jax.random.uniform(kb, (dim,), jnp.float32, -bound, bound))
    return weights, biases


def _reference_forward(t, x, weights, biases, eps=1e-6):
    del t
    h = x
    depth = len(weights)
    for i, (w, b) in enumerate(zip(weights, biases)):
        h = h @ w.T + b
        if i < depth - 1:
            h = jnp.where(h >= 0, h, 0.2 * h)
    nrm = jnp.sqrt(jnp.sum(h * h, axis=1, keepdims=True))
    return h / (nrm + eps)


if __name__ == "__main__":
    key = jax.random.PRNGKey(0)
    t = jnp.float32(0.0)  # unused by the forward pass, kept for signature parity

    for (batch, dim, depth) in [(8, 32, 2), (8, 32, 1)]:
        key, kx, kp = jax.random.split(key, 3)
        x = jax.random.normal(kx, (batch, dim), jnp.float32)
        weights, biases = _init_params(kp, dim, depth)
        ref = _reference_forward(t, x, weights, biases)

        # Tight correctness check with f32 MXU inputs (same math as reference).
        out_f32 = jax.block_until_ready(
            odefunc_forward(t, x, weights, biases, compute_dtype=jnp.float32))
        assert out_f32.shape == (batch, dim)
        assert jnp.allclose(out_f32, ref, atol=1e-5, rtol=1e-5), "f32 path mismatch"

        # Default perf path: bf16 MXU inputs + f32 accumulation, with
        # one-time parameter preparation hoisted out of the forward call.
        w_stack, b_stack, D = prepare_params(weights, biases, jnp.bfloat16)
        out = jax.block_until_ready(
            odefunc_forward_prepared(t, x, w_stack, b_stack, D))
        assert out.shape == (batch, dim)
        assert jnp.allclose(out, ref, atol=2e-2, rtol=2e-2), "bf16 path mismatch"

    print("KERNEL_OK")
</pallas_src>

<mosaic_0001>
module attributes {stable_mosaic.version = 11 : i64} {
  func.func @_odefunc_kernel(%arg0: i32, %arg1: memref<8x128xf32, #tpu.memory_space<vmem>>, %arg2: memref<2x128x128xf32, #tpu.memory_space<vmem>>, %arg3: memref<2x128xf32, #tpu.memory_space<vmem>>, %arg4: memref<8x128xf32, #tpu.memory_space<vmem>>) attributes {dimension_semantics = [#tpu.dimension_semantics<parallel>], iteration_bounds = array<i64: 1>, scalar_prefetch = 0 : i64, scratch_operands = 0 : i64, tpu.core_type = #tpu.core_type<tc>, window_params = [{transform_indices = @transform_0, window_bounds = array<i64: 8, 128>}, {pipeline_mode = #tpu.pipeline_mode<synchronous>, transform_indices = @transform_1, window_bounds = array<i64: 2, 128, 128>}, {pipeline_mode = #tpu.pipeline_mode<synchronous>, transform_indices = @transform_2, window_bounds = array<i64: 2, 128>}, {transform_indices = @transform_3, window_bounds = array<i64: 8, 128>}]} {
    %c0 = arith.constant 0 : index
    %c0_0 = arith.constant 0 : index
    %0 = vector.load %arg1[%c0, %c0_0] : memref<8x128xf32, #tpu.memory_space<vmem>>, vector<8x128xf32>
    %c0_1 = arith.constant 0 : index
    %c0_2 = arith.constant 0 : index
    %c0_3 = arith.constant 0 : index
    %1 = vector.load %arg2[%c0_1, %c0_2, %c0_3] : memref<2x128x128xf32, #tpu.memory_space<vmem>>, vector<1x128x128xf32>
    %2 = vector.shape_cast %1 : vector<1x128x128xf32> to vector<128x128xf32>
    %c0_4 = arith.constant 0 : index
    %c0_5 = arith.constant 0 : index
    %3 = vector.load %arg3[%c0_4, %c0_5] : memref<2x128xf32, #tpu.memory_space<vmem>>, vector<1x128xf32>
    %cst = arith.constant dense<0.000000e+00> : vector<8x128xf32>
    %4 = tpu.matmul %0, %2, %cst {dimension_numbers = #tpu.dot_dimension_numbers<[1], [0], [0], [1], [0, 0, 1, 1], [], []>} : vector<8x128xf32>, vector<128x128xf32>, vector<8x128xf32> -> vector<8x128xf32>
    %5 = vector.broadcast %3 : vector<1x128xf32> to vector<8x128xf32>
    %6 = arith.addf %4, %5 : vector<8x128xf32>
    %cst_6 = arith.constant 2.000000e-01 : f32
    %7 = vector.broadcast %cst_6 : f32 to vector<8x128xf32>
    %8 = arith.mulf %7, %6 : vector<8x128xf32>
    %9 = arith.maximumf %6, %8 : vector<8x128xf32>
    %c1 = arith.constant 1 : index
    %c0_7 = arith.constant 0 : index
    %c0_8 = arith.constant 0 : index
    %10 = vector.load %arg2[%c1, %c0_7, %c0_8] : memref<2x128x128xf32, #tpu.memory_space<vmem>>, vector<1x128x128xf32>
    %11 = vector.shape_cast %10 : vector<1x128x128xf32> to vector<128x128xf32>
    %c1_9 = arith.constant 1 : index
    %c0_10 = arith.constant 0 : index
    %12 = vector.load %arg3[%c1_9, %c0_10] : memref<2x128xf32, #tpu.memory_space<vmem>>, vector<1x128xf32>
    %cst_11 = arith.constant dense<0.000000e+00> : vector<8x128xf32>
    %13 = tpu.matmul %9, %11, %cst_11 {dimension_numbers = #tpu.dot_dimension_numbers<[1], [0], [0], [1], [0, 0, 1, 1], [], []>} : vector<8x128xf32>, vector<128x128xf32>, vector<8x128xf32> -> vector<8x128xf32>
    %14 = vector.broadcast %12 : vector<1x128xf32> to vector<8x128xf32>
    %15 = arith.addf %13, %14 : vector<8x128xf32>
    %16 = arith.mulf %15, %15 : vector<8x128xf32>
    %cst_12 = arith.constant dense<0.000000e+00> : vector<8xf32>
    %17 = vector.multi_reduction <add>, %16, %cst_12 [1] : vector<8x128xf32> to vector<8xf32>
    %18 = vector.shape_cast %17 : vector<8xf32> to vector<8x1xf32>
    %19 = math.sqrt %18 : vector<8x1xf32>
    %cst_13 = arith.constant 9.99999997E-7 : f32
    %20 = vector.broadcast %cst_13 : f32 to vector<8x1xf32>
    %21 = arith.addf %19, %20 : vector<8x1xf32>
    %22 = tpu.reciprocal %21 : vector<8x1xf32> -> vector<8x1xf32>
    %23 = vector.broadcast %22 : vector<8x1xf32> to vector<8x128xf32>
    %24 = arith.mulf %15, %23 : vector<8x128xf32>
    %c0_14 = arith.constant 0 : index
    %c0_15 = arith.constant 0 : index
    %25 = vector.load %arg4[%c0_14, %c0_15] : memref<8x128xf32, #tpu.memory_space<vmem>>, vector<8x128xf32>
    tpu.vector_store %arg4[%c0_14, %c0_15], %24 {strides = array<i32>} : memref<8x128xf32, #tpu.memory_space<vmem>>, vector<8x128xf32>,
    return
  }
  func.func @transform_0(%arg0: i32) -> (i32, i32) {
    %c0_i32 = arith.constant 0 : i32
    %c0_i32_0 = arith.constant 0 : i32
    return %arg0, %c0_i32 : i32, i32
  }
  func.func @transform_1(%arg0: i32) -> (i32, i32, i32) {
    %c0_i32 = arith.constant 0 : i32
    %c0_i32_0 = arith.constant 0 : i32
    %c0_i32_1 = arith.constant 0 : i32
    %c0_i32_2 = arith.constant 0 : i32
    return %c0_i32, %c0_i32_0, %c0_i32_1 : i32, i32, i32
  }
  func.func @transform_2(%arg0: i32) -> (i32, i32) {
    %c0_i32 = arith.constant 0 : i32
    %c0_i32_0 = arith.constant 0 : i32
    %c0_i32_1 = arith.constant 0 : i32
    return %c0_i32, %c0_i32_0 : i32, i32
  }
  func.func @transform_3(%arg0: i32) -> (i32, i32) {
    %c0_i32 = arith.constant 0 : i32
    %c0_i32_0 = arith.constant 0 : i32
    return %arg0, %c0_i32 : i32, i32
  }
}

</mosaic_0001>

<llo_original>
// kernel: tpu_custom_call.1
$region0: #{tpu_custom_call.1}
  #allocation0 [shape = 'u32[]', space=smem, size = 0x4, offset = 0x4, fixed_abs, tag = 'smem constant byte address 0x4 - core index']
  #allocation1 [shape = 'u32[72,128]{1,0:T(1,128)}', space=vmem, size = 0x9000, scoped, tag = 'internal scratch']
  %s0 = inlined_call_operand.hbm [shape: f32[8,128], index: 0, kind: input, shape index: {}]
  %s1 = inlined_call_operand.hbm [shape: f32[2,128,128], index: 1, kind: input, shape index: {}]
  %s2 = inlined_call_operand.hbm [shape: f32[2,128], index: 2, kind: input, shape index: {}]
  %s3 = inlined_call_operand.hbm [shape: f32[8,128], index: 3, kind: output, shape index: {}]
  %s4 = sld [smem:[#allocation0]]
  $region34: #{tpu_custom_call.1} parent=0
    _
  %s6 = ssub.s32 1, %s4
  %s7 = scalar_select 0, %s6, %s4
  $region1: #{tpu_custom_call.1} parent=0
    #allocation2 [shape = 'u8[4096]{0}', space=vmem, size = 0x1000, scoped, tag = 'input window, operand 0, single buffered']
    #allocation3 [shape = 's32[1]{0}', space=sflag, size = 0x4, scoped, tag = 'scoped memory for tpu_custom_call.1']
    #allocation4 [shape = 's32[1]{0}', space=sflag, size = 0x4, scoped, tag = 'scoped memory for tpu_custom_call.1']
    #allocation5 [shape = 'u8[131072]{0}', space=vmem, size = 0x20000, scoped, tag = 'input window, operand 1, single buffered']
    #allocation6 [shape = 's32[1]{0}', space=sflag, size = 0x4, scoped, tag = 'scoped memory for tpu_custom_call.1']
    #allocation7 [shape = 'u8[1024]{0}', space=vmem, size = 0x400, scoped, tag = 'input window, operand 2, single buffered']
    #allocation8 [shape = 'u8[4096]{0}', space=vmem, size = 0x1000, scoped, tag = 'output window, operand 0, single buffered']
    %8 = vsyncpa [#allocation3], 0
    %9 = vsyncpa [#allocation6], 0
    %10 = vsyncpa [#allocation4], 0
    // Predicated region
    $region2: #{tpu_custom_call.1} parent=1 // pred_check
      _
    $region3: #{tpu_custom_call.1} parent=1 // pred_check_branch
      %12 = sbr.rel (0) target = $region5
    $region4: #{tpu_custom_call.1} parent=1 // pred_region
      %14 = vsyncadd [#allocation3], 0
      %s16 = sshll.u32 %s0, 4
      %s17 = int_to_ptr.hbm [resolvable:$true] %s16
      %s18 = sshll.u32 [#allocation2], 4
      %s19 = int_to_ptr.vmem [resolvable:$true] %s18
      %21 = dma.hbm_to_vmem [thread:$0]  %s17, 128, %s19, [#allocation3]
    $region5: #{tpu_custom_call.1} parent=1 // pred_fallthru
      _
    // Predicated region
    $region6: #{tpu_custom_call.1} parent=1 // pred_check
      _
    $region7: #{tpu_custom_call.1} parent=1 // pred_check_branch
      %23 = sbr.rel (0) target = $region9
    $region8: #{tpu_custom_call.1} parent=1 // pred_region
      %25 = vsyncadd [#allocation6], 0
      %s26 = sshll.u32 %s1, 4
      %s27 = int_to_ptr.hbm [resolvable:$true] %s26
      %s28 = sshll.u32 [#allocation5], 4
      %s29 = int_to_ptr.vmem [resolvable:$true] %s28
      %34 = dma.hbm_to_vmem [thread:$0]  %s27, 4096, %s29, [#allocation6], 128, 128, 8
    $region9: #{tpu_custom_call.1} parent=1 // pred_fallthru
      _
    // Predicated region
    $region10: #{tpu_custom_call.1} parent=1 // pred_check
      _
    $region11: #{tpu_custom_call.1} parent=1 // pred_check_branch
      %36 = sbr.rel (0) target = $region13
    $region12: #{tpu_custom_call.1} parent=1 // pred_region
      %38 = vsyncadd [#allocation6], 0
      %s40 = sshll.u32 %s2, 4
      %s41 = int_to_ptr.hbm [resolvable:$true] %s40
      %s42 = sshll.u32 [#allocation7], 4
      %s43 = int_to_ptr.vmem [resolvable:$true] %s42
      %45 = dma.hbm_to_vmem [thread:$0]  %s41, 32, %s43, [#allocation6]
    $region13: #{tpu_custom_call.1} parent=1 // pred_fallthru
      _
    // Predicated region
    $region14: #{tpu_custom_call.1} parent=1 // pred_check
      _
    $region15: #{tpu_custom_call.1} parent=1 // pred_check_branch
      %47 = sbr.rel (0) target = $region17
    $region16: #{tpu_custom_call.1} parent=1 // pred_region
      %49 = dma.done [#allocation3], 128
    $region17: #{tpu_custom_call.1} parent=1 // pred_fallthru
      _
    // Predicated region
    $region18: #{tpu_custom_call.1} parent=1 // pred_check
      _
    $region19: #{tpu_custom_call.1} parent=1 // pred_check_branch
      %51 = sbr.rel (0) target = $region21
    $region20: #{tpu_custom_call.1} parent=1 // pred_region
      %53 = dma.done [#allocation6], 4096
    $region21: #{tpu_custom_call.1} parent=1 // pred_fallthru
      _
    // Predicated region
    $region22: #{tpu_custom_call.1} parent=1 // pred_check
      _
    $region23: #{tpu_custom_call.1} parent=1 // pred_check_branch
      %55 = sbr.rel (0) target = $region25
    $region24: #{tpu_custom_call.1} parent=1 // pred_region
      %57 = dma.done [#allocation6], 32
    $region25: #{tpu_custom_call.1} parent=1 // pred_fallthru
      _
    %v58 = vld [vmem:[#allocation2] sm:$0xff]
    %v59 = vld [vmem:[#allocation5] sm:$0xff]
    %v60 = vld [vmem:[#allocation5 + $0x8] sm:$0xff]
    %v61 = vld [vmem:[#allocation5 + $0x10] sm:$0xff]
    %v62 = vld [vmem:[#allocation5 + $0x18] sm:$0xff]
    %v63 = vld [vmem:[#allocation5 + $0x20] sm:$0xff]
    %v64 = vld [vmem:[#allocation5 + $0x28] sm:$0xff]
    %v65 = vld [vmem:[#allocation5 + $0x30] sm:$0xff]
    %v66 = vld [vmem:[#allocation5 + $0x38] sm:$0xff]
    %v67 = vld [vmem:[#allocation5 + $0x40] sm:$0xff]
    %v68 = vld [vmem:[#allocation5 + $0x48] sm:$0xff]
    %v69 = vld [vmem:[#allocation5 + $0x50] sm:$0xff]
    %v70 = vld [vmem:[#allocation5 + $0x58] sm:$0xff]
    %v71 = vld [vmem:[#allocation5 + $0x60] sm:$0xff]
    %v72 = vld [vmem:[#allocation5 + $0x68] sm:$0xff]
    %v73 = vld [vmem:[#allocation5 + $0x70] sm:$0xff]
    %v74 = vld [vmem:[#allocation5 + $0x78] sm:$0xff]
    %v75 = vld [vmem:[#allocation7] sm:$0x1]
    %v76 = vperm.slane %v75, 0
    %77 = vmatpush.msra.mxu0 %v74
    %78 = vmatpush.msra.mxu0 %v73
    %79 = vmatpush.msra.mxu0 %v72
    %80 = vmatpush.msra.mxu0 %v71
    %81 = vmatpush.msra.mxu0 %v70
    %82 = vmatpush.msra.mxu0 %v69
    %83 = vmatpush.msra.mxu0 %v68
    %84 = vmatpush.msra.mxu0 %v67
    %85 = vmatpush.msra.mxu0 %v66
    %86 = vmatpush.msra.mxu0 %v65
    %87 = vmatpush.msra.mxu0 %v64
    %88 = vmatpush.msra.mxu0 %v63
    %89 = vmatpush.msra.mxu0 %v62
    %90 = vmatpush.msra.mxu0 %v61
    %91 = vmatpush.msra.mxu0 %v60
    %92 = vmatpush.msra.mxu0 %v59
    %93 = vmatmul.f32.gmra.mxu0 %v58
    %v94 = vpop.f32.mrf.mxu0
    %v95 = vadd.f32 %v76, %v94
    %96 = vdwg.mxu0
    %v97 = vmul.f32 %v95, 0.2
    %v98 = vmax.f32 %v95, %v97
    %s99 = scalar_lea.vmem [#allocation5], 128
    %v100 = vld [vmem:[%s99] sm:$0xff]
    %v101 = vld [vmem:[%s99 + $0x8] sm:$0xff]
    %v102 = vld [vmem:[%s99 + $0x10] sm:$0xff]
    %v103 = vld [vmem:[%s99 + $0x18] sm:$0xff]
    %v104 = vld [vmem:[%s99 + $0x20] sm:$0xff]
    %v105 = vld [vmem:[%s99 + $0x28] sm:$0xff]
    %v106 = vld [vmem:[%s99 + $0x30] sm:$0xff]
    %v107 = vld [vmem:[%s99 + $0x38] sm:$0xff]
    %v108 = vld [vmem:[%s99 + $0x40] sm:$0xff]
    %v109 = vld [vmem:[%s99 + $0x48] sm:$0xff]
    %v110 = vld [vmem:[%s99 + $0x50] sm:$0xff]
    %v111 = vld [vmem:[%s99 + $0x58] sm:$0xff]
    %v112 = vld [vmem:[%s99 + $0x60] sm:$0xff]
    %v113 = vld [vmem:[%s99 + $0x68] sm:$0xff]
    %v114 = vld [vmem:[%s99 + $0x70] sm:$0xff]
    %v115 = vld [vmem:[%s99 + $0x78] sm:$0xff]
    %v116 = vld [vmem:[#allocation7 + $0x1] sm:$0x1]
    %v117 = vperm.slane %v116, 0
    %118 = vmatpush.msra.mxu0 %v115
    %119 = vmatpush.msra.mxu0 %v114
    %120 = vmatpush.msra.mxu0 %v113
    %121 = vmatpush.msra.mxu0 %v112
    %122 = vmatpush.msra.mxu0 %v111
    %123 = vmatpush.msra.mxu0 %v110
    %124 = vmatpush.msra.mxu0 %v109
    %125 = vmatpush.msra.mxu0 %v108
    %126 = vmatpush.msra.mxu0 %v107
    %127 = vmatpush.msra.mxu0 %v106
    %128 = vmatpush.msra.mxu0 %v105
    %129 = vmatpush.msra.mxu0 %v104
    %130 = vmatpush.msra.mxu0 %v103
    %131 = vmatpush.msra.mxu0 %v102
    %132 = vmatpush.msra.mxu0 %v101
    %133 = vmatpush.msra.mxu0 %v100
    %134 = vmatmul.f32.gmra.mxu0 %v98
    %v135 = vpop.f32.mrf.mxu0
    %v136 = vadd.f32 %v117, %v135
    %137 = vdwg.mxu0
    %v138 = vmul.f32 %v136, %v136
    %139 = vadd.xlane.f32.xlu0 %v138
    %v140 = vpop.xlane.xlu0 %139
    %v141 = vrsqrt.pop %v140
    %v142 = vmul.f32 %v141, %v140
    %v143 = vmul.f32 %v142, %v141
    %v144 = vmul.f32 0.5, %v143
    %v145 = vsub.f32 1.5, %v144
    %v146 = vmul.f32 %v141, %v145
    %v147 = vmul.f32 %v140, %v146
    %vm148 = vcmp.eq.f32.partialorder %v140, inf
    %v149 = vsel %vm148, %v140, %v147
    %vm150 = vcmp.eq.f32.partialorder %v140, 0.0
    %v151 = vand.u32 %v140, 2147483648
    %v152 = vsel %vm150, %v151, %v149
    %v153 = vadd.f32 %v152, 1e-06
    %v154 = vrcp.pop %v153
    %v155 = vmul.f32 %v153, %v154
    %v156 = vsub.f32 1.0, %v155
    %v157 = vmul.f32 %v154, %v156
    %v158 = vadd.f32 %v154, %v157
    %vm159 = vweird.f32 %v153
    %vm160 = vweird.f32 %v154
    %vm161 = vmor %vm159, %vm160
    %v162 = vsel %vm161, %v154, %v158
    %v163 = vand.u32 2147483647, %v153
    %vm164 = vcmp.eq.f32.partialorder %v163, 8.507059e+37
    %v165 = vand.u32 %v153, 2147483648
    %v166 = vor.u32 1.1754944e-38, %v165
    %v167 = vsel %vm164, %v166, %v162
    %v168 = vmul.f32 %v136, %v167
    %169 = vst [vmem:[#allocation8] sm:$0xff] %v168
    // Predicated region
    $region26: #{tpu_custom_call.1} parent=1 // pred_check
      _
    $region27: #{tpu_custom_call.1} parent=1 // pred_check_branch
      %171 = sbr.rel (0) target = $region29
    $region28: #{tpu_custom_call.1} parent=1 // pred_region
      %173 = vsyncadd [#allocation4], 0
      %s175 = sshll.u32 [#allocation8], 4
      %s176 = int_to_ptr.vmem [resolvable:$true] %s175
      %s177 = sshll.u32 %s3, 4
      %s178 = int_to_ptr.hbm [resolvable:$true] %s177
      %180 = dma.vmem_to_hbm [thread:$0]  %s176, 128, %s178, [#allocation4]
    $region29: #{tpu_custom_call.1} parent=1 // pred_fallthru
      _
    // Predicated region
    $region30: #{tpu_custom_call.1} parent=1 // pred_check
      _
    $region31: #{tpu_custom_call.1} parent=1 // pred_check_branch
      %182 = sbr.rel (0) target = $region33
    $region32: #{tpu_custom_call.1} parent=1 // pred_region
      %184 = dma.done [#allocation4], 128
    $region33: #{tpu_custom_call.1} parent=1 // pred_fallthru
      _
    %185 = vsyncpa [#allocation3], 1
    %186 = vsyncpa [#allocation6], 1
    %187 = vsyncpa [#allocation4], 1

</llo_original>
